<compile_context>
chip_gen: v7x
topology: tpu7x:2x2x1
jax: 0.10.0
libtpu: 0.0.40
codegen_flags: <defaults>
</compile_context>

<pallas_src>
import functools

import jax
import jax.numpy as jnp
from jax.experimental import pallas as pl
from jax.experimental.pallas import tpu as pltpu


def _round_up(x, m):
    return ((x + m - 1) // m) * m


def _choose_tb(bs, block_bs):
    """Batch tile: full batch when tiny, otherwise multiple of 8 with >=2 grid steps."""
    if bs < 16:
        return bs
    half = -(-bs // 2)                      # cdiv(bs, 2) -> at least 2 batch blocks
    tb = _round_up(half, 8)
    return min(block_bs, tb)


def _choose_tk(K, block_k):
    """K tile: full K when small, else the largest multiple-of-128 divisor <= block_k."""
    if K <= block_k:
        return K
    cand = block_k - (block_k % 128)
    while cand >= 128:
        if K % cand == 0:
            return cand
        cand -= 128
    return K                                 # fallback: single (large) K block


def _cls_head_avg_kernel(x_ref, w_ref, b_ref, o_ref, acc_ref):
    # x_ref: (TB, TK) ; w_ref: (TK, C_pad) ; b_ref: (1, C_pad)
    # o_ref: (TB, C_pad) ; acc_ref: (TB, C_pad) f32 VMEM scratch
    k = pl.program_id(1)

    @pl.when(k == 0)
    def _init():
        acc_ref[...] = jnp.zeros_like(acc_ref)

    # Mean-pool + linear fused into one MXU contraction over K = F * num_patch
    # (weight was repeated along the patch axis and divided by num_patch in the
    # factory, mathematically identical to mean-then-linear).
    acc_ref[...] += jnp.dot(x_ref[...], w_ref[...],
                            preferred_element_type=jnp.float32)

    @pl.when(k == pl.num_programs(1) - 1)
    def _finalize():
        o_ref[...] = (acc_ref[...] + b_ref[...].astype(jnp.float32)).astype(o_ref.dtype)


def make_classification_head_avg(weight, bias, num_patch, *,
                                 compute_dtype=None, block_bs=256, block_k=2048):
    """
    weight: [n_classes, n_vars*d_model]   (PyTorch nn.Linear convention)
    bias:   [n_classes]
    Returns apply(x) with x: [bs, n_vars, d_model, num_patch] -> [bs, n_classes].

    The (per-call-expensive) weight expansion / class padding happens ONCE here.
    """
    n_classes, F = weight.shape
    K = F * num_patch
    C_pad = _round_up(max(n_classes, 1), 128)
    dtype = jnp.dtype(compute_dtype) if compute_dtype is not None else jnp.dtype(weight.dtype)

    # W_exp[f*P + p, c] = weight[c, f] / P   (matches row-major flatten of x)
    w_exp = (jnp.repeat(weight.T, num_patch, axis=0) / float(num_patch)).astype(dtype)
    w_exp = jnp.pad(w_exp, ((0, 0), (0, C_pad - n_classes)))
    b_pad = jnp.pad(bias.reshape(1, n_classes).astype(jnp.float32),
                    ((0, 0), (0, C_pad - n_classes)))

    def apply(x):
        bs, n_vars, d_model, np_ = x.shape
        assert n_vars * d_model == F and np_ == num_patch, "shape mismatch with head params"

        # Zero-copy lane-dense view (x is contiguous): [bs, F*P].
        x2d = x.reshape(bs, K)
        if x2d.dtype != dtype:
            # Optional precision/bandwidth tradeoff chosen at factory time.
            x2d = x2d.astype(dtype)

        tb = _choose_tb(bs, block_bs)
        tk = _choose_tk(K, block_k)
        nb = pl.cdiv(bs, tb)      # partial last block allowed; no HBM batch padding
        nk = K // tk              # tk divides K by construction (or tk == K)

        itemsize = dtype.itemsize
        est_vmem = (2 * tb * tk * itemsize        # x (double-buffered)
                    + 2 * tk * C_pad * itemsize   # weight block
                    + 2 * C_pad * 4               # bias
                    + 2 * tb * C_pad * itemsize   # output block
                    + tb * C_pad * 4)             # f32 accumulator scratch
        vmem_limit = int(min(max(1.5 * est_vmem, 32 * 1024 * 1024), 128 * 1024 * 1024))

        cost = pl.CostEstimate(
            flops=2 * bs * K * C_pad,
            transcendentals=0,
            bytes_accessed=(bs * K + K * C_pad + bs * C_pad) * itemsize,
        )

        out = pl.pallas_call(
            _cls_head_avg_kernel,
            out_shape=jax.ShapeDtypeStruct((bs, C_pad), x.dtype),
            grid_spec=pltpu.PrefetchScalarGridSpec(
                num_scalar_prefetch=0,
                grid=(nb, nk),
                in_specs=[
                    pl.BlockSpec((tb, tk), lambda i, k: (i, k)),        # x tile
                    pl.BlockSpec((tk, C_pad), lambda i, k: (k, 0)),     # weight tile
                    pl.BlockSpec((1, C_pad), lambda i, k: (0, 0)),      # bias (resident)
                ],
                out_specs=pl.BlockSpec((tb, C_pad), lambda i, k: (i, 0)),
                scratch_shapes=[pltpu.VMEM((tb, C_pad), jnp.float32)],
            ),
            compiler_params=pltpu.CompilerParams(
                dimension_semantics=("parallel", "arbitrary"),
                vmem_limit_bytes=vmem_limit,
            ),
            cost_estimate=cost,
        )(x2d, w_exp, b_pad)

        return out[:, :n_classes]

    return apply


def classification_head_avg(x, weight, bias, **kwargs):
    """One-shot convenience wrapper (prefer the factory to hoist the weight expansion)."""
    num_patch = x.shape[3]
    return make_classification_head_avg(weight, bias, num_patch, **kwargs)(x)


def _reference(x, weight, bias):
    bs, n_vars, d_model, num_patch = x.shape
    pooled = x.reshape(bs, n_vars * d_model, num_patch).mean(axis=2)
    return pooled @ weight.T + bias


if __name__ == "__main__":
    # Small shapes consistent with the module.
    bs, n_vars, d_model, num_patch, n_classes = 2, 4, 32, 8, 5
    F = n_vars * d_model

    key = jax.random.PRNGKey(0)
    kx, kw, kb = jax.random.split(key, 3)
    x = jax.random.normal(kx, (bs, n_vars, d_model, num_patch), dtype=jnp.float32)
    bound = 1.0 / (F ** 0.5)
    weight = jax.random.uniform(kw, (n_classes, F), minval=-bound, maxval=bound,
                                dtype=jnp.float32)
    bias = jax.random.uniform(kb, (n_classes,), minval=-bound, maxval=bound,
                              dtype=jnp.float32)

    # Factory: weight expansion + class-dim padding hoisted out of the call path.
    head = make_classification_head_avg(weight, bias, num_patch)

    # 1) Single-block path (tiny batch, single K block).
    y = jax.block_until_ready(head(x))
    y_ref = _reference(x, weight, bias)
    assert y.shape == (bs, n_classes)
    assert jnp.allclose(y, y_ref, atol=1e-5, rtol=1e-5), "mismatch vs reference"

    # 2) Multi-block path: partial batch block (no HBM padding) + K-tiled accumulation.
    bs2 = 20
    x2 = jax.random.normal(jax.random.PRNGKey(1),
                           (bs2, n_vars, d_model, num_patch), dtype=jnp.float32)
    head2 = make_classification_head_avg(weight, bias, num_patch,
                                         block_bs=8, block_k=256)
    y2 = jax.block_until_ready(head2(x2))
    y2_ref = _reference(x2, weight, bias)
    assert y2.shape == (bs2, n_classes)
    assert jnp.allclose(y2, y2_ref, atol=1e-5, rtol=1e-5), "mismatch vs reference (tiled)"

    # TODO(synk): nn.Dropout is identity in eval mode; training-mode dropout
    # (pltpu.prng_* + mask on the pooled features) is not implemented here.
    print("KERNEL_OK")
</pallas_src>

<mosaic_0001>
module attributes {stable_mosaic.version = 11 : i64} {
  func.func @_cls_head_avg_kernel(%arg0: i32, %arg1: i32, %arg2: memref<2x1024xf32, #tpu.memory_space<vmem>>, %arg3: memref<1024x128xf32, #tpu.memory_space<vmem>>, %arg4: memref<1x128xf32, #tpu.memory_space<vmem>>, %arg5: memref<2x128xf32, #tpu.memory_space<vmem>>, %arg6: memref<2x128xf32, #tpu.memory_space<vmem>>) attributes {dimension_semantics = [#tpu.dimension_semantics<parallel>, #tpu.dimension_semantics<arbitrary>], iteration_bounds = array<i64: 1, 1>, scalar_prefetch = 0 : i64, scratch_operands = 1 : i64, tpu.core_type = #tpu.core_type<tc>, window_params = [{transform_indices = @transform_0, window_bounds = array<i64: 2, 1024>}, {transform_indices = @transform_1, window_bounds = array<i64: 1024, 128>}, {pipeline_mode = #tpu.pipeline_mode<synchronous>, transform_indices = @transform_2, window_bounds = array<i64: 1, 128>}, {transform_indices = @transform_3, window_bounds = array<i64: 2, 128>}]} {
    %c0_i32 = arith.constant 0 : i32
    %0 = arith.cmpi eq, %arg1, %c0_i32 : i32
    %1 = arith.extui %0 : i1 to i32
    %c0_i32_0 = arith.constant 0 : i32
    %2 = arith.cmpi ne, %1, %c0_i32_0 : i32
    scf.if %2 {
      %cst_10 = arith.constant 0.000000e+00 : f32
      %12 = vector.broadcast %cst_10 : f32 to vector<2x128xf32>
      %c0_11 = arith.constant 0 : index
      %c0_12 = arith.constant 0 : index
      %13 = vector.load %arg6[%c0_11, %c0_12] : memref<2x128xf32, #tpu.memory_space<vmem>>, vector<2x128xf32>
      tpu.vector_store %arg6[%c0_11, %c0_12], %12 {strides = array<i32>} : memref<2x128xf32, #tpu.memory_space<vmem>>, vector<2x128xf32>,
    } else {
    }
    %c0 = arith.constant 0 : index
    %c0_1 = arith.constant 0 : index
    %3 = vector.load %arg6[%c0, %c0_1] : memref<2x128xf32, #tpu.memory_space<vmem>>, vector<2x128xf32>
    %c0_2 = arith.constant 0 : index
    %c0_3 = arith.constant 0 : index
    %4 = vector.load %arg2[%c0_2, %c0_3] : memref<2x1024xf32, #tpu.memory_space<vmem>>, vector<2x1024xf32>
    %c0_4 = arith.constant 0 : index
    %c0_5 = arith.constant 0 : index
    %5 = vector.load %arg3[%c0_4, %c0_5] : memref<1024x128xf32, #tpu.memory_space<vmem>>, vector<1024x128xf32>
    %cst = arith.constant dense<0.000000e+00> : vector<2x128xf32>
    %6 = tpu.matmul %4, %5, %cst {dimension_numbers = #tpu.dot_dimension_numbers<[1], [0], [0], [1], [0, 0, 1, 1], [], []>} : vector<2x1024xf32>, vector<1024x128xf32>, vector<2x128xf32> -> vector<2x128xf32>
    %7 = arith.addf %3, %6 : vector<2x128xf32>
    %c0_6 = arith.constant 0 : index
    %c0_7 = arith.constant 0 : index
    %8 = vector.load %arg6[%c0_6, %c0_7] : memref<2x128xf32, #tpu.memory_space<vmem>>, vector<2x128xf32>
    tpu.vector_store %arg6[%c0_6, %c0_7], %7 {strides = array<i32>} : memref<2x128xf32, #tpu.memory_space<vmem>>, vector<2x128xf32>,
    %c0_i32_8 = arith.constant 0 : i32
    %9 = arith.cmpi eq, %arg1, %c0_i32_8 : i32
    %10 = arith.extui %9 : i1 to i32
    %c0_i32_9 = arith.constant 0 : i32
    %11 = arith.cmpi ne, %10, %c0_i32_9 : i32
    scf.if %11 {
      %c0_10 = arith.constant 0 : index
      %c0_11 = arith.constant 0 : index
      %12 = vector.load %arg6[%c0_10, %c0_11] : memref<2x128xf32, #tpu.memory_space<vmem>>, vector<2x128xf32>
      %c0_12 = arith.constant 0 : index
      %c0_13 = arith.constant 0 : index
      %13 = vector.load %arg4[%c0_12, %c0_13] : memref<1x128xf32, #tpu.memory_space<vmem>>, vector<1x128xf32>
      %14 = vector.broadcast %13 : vector<1x128xf32> to vector<2x128xf32>
      %15 = arith.addf %12, %14 : vector<2x128xf32>
      %c0_14 = arith.constant 0 : index
      %c0_15 = arith.constant 0 : index
      %16 = vector.load %arg5[%c0_14, %c0_15] : memref<2x128xf32, #tpu.memory_space<vmem>>, vector<2x128xf32>
      tpu.vector_store %arg5[%c0_14, %c0_15], %15 {strides = array<i32>} : memref<2x128xf32, #tpu.memory_space<vmem>>, vector<2x128xf32>,
    } else {
    }
    return
  }
  func.func @transform_0(%arg0: i32, %arg1: i32) -> (i32, i32) {
    %c0_i32 = arith.constant 0 : i32
    return %arg0, %arg1 : i32, i32
  }
  func.func @transform_1(%arg0: i32, %arg1: i32) -> (i32, i32) {
    %c0_i32 = arith.constant 0 : i32
    %c0_i32_0 = arith.constant 0 : i32
    return %arg1, %c0_i32 : i32, i32
  }
  func.func @transform_2(%arg0: i32, %arg1: i32) -> (i32, i32) {
    %c0_i32 = arith.constant 0 : i32
    %c0_i32_0 = arith.constant 0 : i32
    %c0_i32_1 = arith.constant 0 : i32
    return %c0_i32, %c0_i32_0 : i32, i32
  }
  func.func @transform_3(%arg0: i32, %arg1: i32) -> (i32, i32) {
    %c0_i32 = arith.constant 0 : i32
    %c0_i32_0 = arith.constant 0 : i32
    return %arg0, %c0_i32 : i32, i32
  }
}

</mosaic_0001>

<llo_original>
// kernel: tpu_custom_call.1
$region0: #{tpu_custom_call.1}
  #allocation0 [shape = 'u32[]', space=smem, size = 0x4, offset = 0x4, fixed_abs, tag = 'smem constant byte address 0x4 - core index']
  #allocation1 [shape = 'u32[144,128]{1,0:T(1,128)}', space=vmem, size = 0x12000, scoped, tag = 'internal scratch']
  #allocation2 [shape = 'f32[2,128]{1,0:T(2,128)}', space=vmem, size = 0x400, scoped, tag = 'scratch operand']
  %s0 = inlined_call_operand.hbm [shape: f32[2,1024], index: 0, kind: input, shape index: {}]
  %s1 = inlined_call_operand.hbm [shape: f32[1024,128], index: 1, kind: input, shape index: {}]
  %s2 = inlined_call_operand.vmem [shape: f32[1,128], index: 2, kind: input, shape index: {}]
  %s3 = inlined_call_operand.hbm [shape: f32[2,128], index: 3, kind: output, shape index: {}]
  %s4 = sld [smem:[#allocation0]]
  $region38: #{tpu_custom_call.1} parent=0
    _
  %s6 = ssub.s32 1, %s4
  %s7 = scalar_select 0, %s6, %s4
  $region1: #{tpu_custom_call.1} parent=0
    #allocation3 [shape = 'u8[8192]{0}', space=vmem, size = 0x2000, scoped, tag = 'input window, operand 0, single buffered']
    #allocation4 [shape = 's32[1]{0}', space=sflag, size = 0x4, scoped, tag = 'scoped memory for tpu_custom_call.1']
    #allocation5 [shape = 's32[1]{0}', space=sflag, size = 0x4, scoped, tag = 'scoped memory for tpu_custom_call.1']
    #allocation6 [shape = 'u8[524288]{0}', space=vmem, size = 0x80000, scoped, tag = 'input window, operand 1, single buffered']
    #allocation7 [shape = 's32[1]{0}', space=sflag, size = 0x4, scoped, tag = 'scoped memory for tpu_custom_call.1']
    #allocation8 [shape = 'u8[1024]{0}', space=vmem, size = 0x400, scoped, tag = 'output window, operand 0, single buffered']
    %8 = vsyncpa [#allocation4], 0
    %9 = vsyncpa [#allocation7], 0
    %10 = vsyncpa [#allocation5], 0
    // Predicated region
    $region2: #{tpu_custom_call.1} parent=1 // pred_check
      _
    $region3: #{tpu_custom_call.1} parent=1 // pred_check_branch
      %12 = sbr.rel (0) target = $region5
    $region4: #{tpu_custom_call.1} parent=1 // pred_region
      %s14 = ssub.s32 256, 256
      %15 = vsyncadd [#allocation4], %s14
      %s17 = sshll.u32 [#allocation3], 4
      %s18 = int_to_ptr.vmem [resolvable:$true] %s17
      %20 = dma.hbm_to_vmem [thread:$0]  %s0, 256, %s18, [#allocation4]
    $region5: #{tpu_custom_call.1} parent=1 // pred_fallthru
      _
    // Predicated region
    $region6: #{tpu_custom_call.1} parent=1 // pred_check
      _
    $region7: #{tpu_custom_call.1} parent=1 // pred_check_branch
      %22 = sbr.rel (0) target = $region9
    $region8: #{tpu_custom_call.1} parent=1 // pred_region
      %s24 = ssub.s32 16384, 16384
      %25 = vsyncadd [#allocation7], %s24
      %s26 = sshll.u32 [#allocation6], 4
      %s27 = int_to_ptr.vmem [resolvable:$true] %s26
      %32 = dma.hbm_to_vmem [thread:$0]  %s1, 16384, %s27, [#allocation7], 128, 128, 8
    $region9: #{tpu_custom_call.1} parent=1 // pred_fallthru
      _
    // Predicated region
    $region10: #{tpu_custom_call.1} parent=1 // pred_check
      _
    $region11: #{tpu_custom_call.1} parent=1 // pred_check_branch
      %34 = sbr.rel (0) target = $region13
    $region12: #{tpu_custom_call.1} parent=1 // pred_region
      _
    $region13: #{tpu_custom_call.1} parent=1 // pred_fallthru
      _
    // Predicated region
    $region14: #{tpu_custom_call.1} parent=1 // pred_check
      _
    $region15: #{tpu_custom_call.1} parent=1 // pred_check_branch
      %36 = sbr.rel (0) target = $region17
    $region16: #{tpu_custom_call.1} parent=1 // pred_region
      %37 = dma.done [#allocation4], 256
    $region17: #{tpu_custom_call.1} parent=1 // pred_fallthru
      _
    // Predicated region
    $region18: #{tpu_custom_call.1} parent=1 // pred_check
      _
    $region19: #{tpu_custom_call.1} parent=1 // pred_check_branch
      %39 = sbr.rel (0) target = $region21
    $region20: #{tpu_custom_call.1} parent=1 // pred_region
      %40 = dma.done [#allocation7], 16384
    $region21: #{tpu_custom_call.1} parent=1 // pred_fallthru
      _
    %p41 = scmp.eq.s32.totalorder 0, 0
    // Predicated region
    $region22: #{tpu_custom_call.1} parent=1 // pred_check
      %p42 = pneg %p41
    $region23: #{tpu_custom_call.1} parent=1 // pred_check_branch
      %44 = sbr.rel (%p42) target = $region25
    $region24: #{tpu_custom_call.1} parent=1 // pred_region
      %45 = vst [vmem:[#allocation2] sm:$0x3] 0.0
    $region25: #{tpu_custom_call.1} parent=1 // pred_fallthru
      _
    %v46 = vld [vmem:[#allocation2] sm:$0x3]
    %v47 = vld [vmem:[#allocation3] sm:$0xff]
    %v48 = vld [vmem:[#allocation3 + $0x8] sm:$0xff]
    %v49 = vld [vmem:[#allocation6] sm:$0xff]
    %v50 = vld [vmem:[#allocation6 + $0x8] sm:$0xff]
    %v51 = vld [vmem:[#allocation6 + $0x10] sm:$0xff]
    %v52 = vld [vmem:[#allocation6 + $0x18] sm:$0xff]
    %v53 = vld [vmem:[#allocation6 + $0x20] sm:$0xff]
    %v54 = vld [vmem:[#allocation6 + $0x28] sm:$0xff]
    %v55 = vld [vmem:[#allocation6 + $0x30] sm:$0xff]
    %v56 = vld [vmem:[#allocation6 + $0x38] sm:$0xff]
    %v57 = vld [vmem:[#allocation6 + $0x40] sm:$0xff]
    %v58 = vld [vmem:[#allocation6 + $0x48] sm:$0xff]
    %v59 = vld [vmem:[#allocation6 + $0x50] sm:$0xff]
    %v60 = vld [vmem:[#allocation6 + $0x58] sm:$0xff]
    %v61 = vld [vmem:[#allocation6 + $0x60] sm:$0xff]
    %v62 = vld [vmem:[#allocation6 + $0x68] sm:$0xff]
    %v63 = vld [vmem:[#allocation6 + $0x70] sm:$0xff]
    %v64 = vld [vmem:[#allocation6 + $0x78] sm:$0xff]
    %v65 = vld [vmem:[#allocation6 + $0x80] sm:$0xff]
    %v66 = vld [vmem:[#allocation6 + $0x88] sm:$0xff]
    %v67 = vld [vmem:[#allocation6 + $0x90] sm:$0xff]
    %v68 = vld [vmem:[#allocation6 + $0x98] sm:$0xff]
    %v69 = vld [vmem:[#allocation6 + $0xa0] sm:$0xff]
    %v70 = vld [vmem:[#allocation6 + $0xa8] sm:$0xff]
    %v71 = vld [vmem:[#allocation6 + $0xb0] sm:$0xff]
    %v72 = vld [vmem:[#allocation6 + $0xb8] sm:$0xff]
    %v73 = vld [vmem:[#allocation6 + $0xc0] sm:$0xff]
    %v74 = vld [vmem:[#allocation6 + $0xc8] sm:$0xff]
    %v75 = vld [vmem:[#allocation6 + $0xd0] sm:$0xff]
    %v76 = vld [vmem:[#allocation6 + $0xd8] sm:$0xff]
    %v77 = vld [vmem:[#allocation6 + $0xe0] sm:$0xff]
    %v78 = vld [vmem:[#allocation6 + $0xe8] sm:$0xff]
    %v79 = vld [vmem:[#allocation6 + $0xf0] sm:$0xff]
    %v80 = vld [vmem:[#allocation6 + $0xf8] sm:$0xff]
    %v81 = vld [vmem:[#allocation6 + $0x100] sm:$0xff]
    %v82 = vld [vmem:[#allocation6 + $0x108] sm:$0xff]
    %v83 = vld [vmem:[#allocation6 + $0x110] sm:$0xff]
    %v84 = vld [vmem:[#allocation6 + $0x118] sm:$0xff]
    %v85 = vld [vmem:[#allocation6 + $0x120] sm:$0xff]
    %v86 = vld [vmem:[#allocation6 + $0x128] sm:$0xff]
    %v87 = vld [vmem:[#allocation6 + $0x130] sm:$0xff]
    %v88 = vld [vmem:[#allocation6 + $0x138] sm:$0xff]
    %v89 = vld [vmem:[#allocation6 + $0x140] sm:$0xff]
    %v90 = vld [vmem:[#allocation6 + $0x148] sm:$0xff]
    %v91 = vld [vmem:[#allocation6 + $0x150] sm:$0xff]
    %v92 = vld [vmem:[#allocation6 + $0x158] sm:$0xff]
    %v93 = vld [vmem:[#allocation6 + $0x160] sm:$0xff]
    %v94 = vld [vmem:[#allocation6 + $0x168] sm:$0xff]
    %v95 = vld [vmem:[#allocation6 + $0x170] sm:$0xff]
    %v96 = vld [vmem:[#allocation6 + $0x178] sm:$0xff]
    %v97 = vld [vmem:[#allocation6 + $0x180] sm:$0xff]
    %v98 = vld [vmem:[#allocation6 + $0x188] sm:$0xff]
    %v99 = vld [vmem:[#allocation6 + $0x190] sm:$0xff]
    %v100 = vld [vmem:[#allocation6 + $0x198] sm:$0xff]
    %v101 = vld [vmem:[#allocation6 + $0x1a0] sm:$0xff]
    %v102 = vld [vmem:[#allocation6 + $0x1a8] sm:$0xff]
    %v103 = vld [vmem:[#allocation6 + $0x1b0] sm:$0xff]
    %v104 = vld [vmem:[#allocation6 + $0x1b8] sm:$0xff]
    %v105 = vld [vmem:[#allocation6 + $0x1c0] sm:$0xff]
    %v106 = vld [vmem:[#allocation6 + $0x1c8] sm:$0xff]
    %v107 = vld [vmem:[#allocation6 + $0x1d0] sm:$0xff]
    %v108 = vld [vmem:[#allocation6 + $0x1d8] sm:$0xff]
    %v109 = vld [vmem:[#allocation6 + $0x1e0] sm:$0xff]
    %v110 = vld [vmem:[#allocation6 + $0x1e8] sm:$0xff]
    %v111 = vld [vmem:[#allocation6 + $0x1f0] sm:$0xff]
    %v112 = vld [vmem:[#allocation6 + $0x1f8] sm:$0xff]
    %v113 = vld [vmem:[#allocation6 + $0x200] sm:$0xff]
    %v114 = vld [vmem:[#allocation6 + $0x208] sm:$0xff]
    %v115 = vld [vmem:[#allocation6 + $0x210] sm:$0xff]
    %v116 = vld [vmem:[#allocation6 + $0x218] sm:$0xff]
    %v117 = vld [vmem:[#allocation6 + $0x220] sm:$0xff]
    %v118 = vld [vmem:[#allocation6 + $0x228] sm:$0xff]
    %v119 = vld [vmem:[#allocation6 + $0x230] sm:$0xff]
    %v120 = vld [vmem:[#allocation6 + $0x238] sm:$0xff]
    %v121 = vld [vmem:[#allocation6 + $0x240] sm:$0xff]
    %v122 = vld [vmem:[#allocation6 + $0x248] sm:$0xff]
    %v123 = vld [vmem:[#allocation6 + $0x250] sm:$0xff]
    %v124 = vld [vmem:[#allocation6 + $0x258] sm:$0xff]
    %v125 = vld [vmem:[#allocation6 + $0x260] sm:$0xff]
    %v126 = vld [vmem:[#allocation6 + $0x268] sm:$0xff]
    %v127 = vld [vmem:[#allocation6 + $0x270] sm:$0xff]
    %v128 = vld [vmem:[#allocation6 + $0x278] sm:$0xff]
    %v129 = vld [vmem:[#allocation6 + $0x280] sm:$0xff]
    %v130 = vld [vmem:[#allocation6 + $0x288] sm:$0xff]
    %v131 = vld [vmem:[#allocation6 + $0x290] sm:$0xff]
    %v132 = vld [vmem:[#allocation6 + $0x298] sm:$0xff]
    %v133 = vld [vmem:[#allocation6 + $0x2a0] sm:$0xff]
    %v134 = vld [vmem:[#allocation6 + $0x2a8] sm:$0xff]
    %v135 = vld [vmem:[#allocation6 + $0x2b0] sm:$0xff]
    %v136 = vld [vmem:[#allocation6 + $0x2b8] sm:$0xff]
    %v137 = vld [vmem:[#allocation6 + $0x2c0] sm:$0xff]
    %v138 = vld [vmem:[#allocation6 + $0x2c8] sm:$0xff]
    %v139 = vld [vmem:[#allocation6 + $0x2d0] sm:$0xff]
    %v140 = vld [vmem:[#allocation6 + $0x2d8] sm:$0xff]
    %v141 = vld [vmem:[#allocation6 + $0x2e0] sm:$0xff]
    %v142 = vld [vmem:[#allocation6 + $0x2e8] sm:$0xff]
    %v143 = vld [vmem:[#allocation6 + $0x2f0] sm:$0xff]
    %v144 = vld [vmem:[#allocation6 + $0x2f8] sm:$0xff]
    %v145 = vld [vmem:[#allocation6 + $0x300] sm:$0xff]
    %v146 = vld [vmem:[#allocation6 + $0x308] sm:$0xff]
    %v147 = vld [vmem:[#allocation6 + $0x310] sm:$0xff]
    %v148 = vld [vmem:[#allocation6 + $0x318] sm:$0xff]
    %v149 = vld [vmem:[#allocation6 + $0x320] sm:$0xff]
    %v150 = vld [vmem:[#allocation6 + $0x328] sm:$0xff]
    %v151 = vld [vmem:[#allocation6 + $0x330] sm:$0xff]
    %v152 = vld [vmem:[#allocation6 + $0x338] sm:$0xff]
    %v153 = vld [vmem:[#allocation6 + $0x340] sm:$0xff]
    %v154 = vld [vmem:[#allocation6 + $0x348] sm:$0xff]
    %v155 = vld [vmem:[#allocation6 + $0x350] sm:$0xff]
    %v156 = vld [vmem:[#allocation6 + $0x358] sm:$0xff]
    %v157 = vld [vmem:[#allocation6 + $0x360] sm:$0xff]
    %v158 = vld [vmem:[#allocation6 + $0x368] sm:$0xff]
    %v159 = vld [vmem:[#allocation6 + $0x370] sm:$0xff]
    %v160 = vld [vmem:[#allocation6 + $0x378] sm:$0xff]
    %v161 = vld [vmem:[#allocation6 + $0x380] sm:$0xff]
    %v162 = vld [vmem:[#allocation6 + $0x388] sm:$0xff]
    %v163 = vld [vmem:[#allocation6 + $0x390] sm:$0xff]
    %v164 = vld [vmem:[#allocation6 + $0x398] sm:$0xff]
    %v165 = vld [vmem:[#allocation6 + $0x3a0] sm:$0xff]
    %v166 = vld [vmem:[#allocation6 + $0x3a8] sm:$0xff]
    %v167 = vld [vmem:[#allocation6 + $0x3b0] sm:$0xff]
    %v168 = vld [vmem:[#allocation6 + $0x3b8] sm:$0xff]
    %v169 = vld [vmem:[#allocation6 + $0x3c0] sm:$0xff]
    %v170 = vld [vmem:[#allocation6 + $0x3c8] sm:$0xff]
    %v171 = vld [vmem:[#allocation6 + $0x3d0] sm:$0xff]
    %v172 = vld [vmem:[#allocation6 + $0x3d8] sm:$0xff]
    %v173 = vld [vmem:[#allocation6 + $0x3e0] sm:$0xff]
    %v174 = vld [vmem:[#allocation6 + $0x3e8] sm:$0xff]
    %v175 = vld [vmem:[#allocation6 + $0x3f0] sm:$0xff]
    %v176 = vld [vmem:[#allocation6 + $0x3f8] sm:$0xff]
    %v179 = vcombine.high %v47, %v47
    %v181 = vunpack.c.l.s4 1983009808
    %v182 = vunpack.c.0.s8 %v181
    %v183 = vlaneseq
    %v184 = vshrl.u32 %v183, 7
    %v185 = vsub.s32 %v182, %v184
    %v186 = vrot.slane %v47, %v185
    %v188 = vunpack.c.l.s4 1983009808
    %v189 = vunpack.c.0.s8 %v188
    %v190 = vlaneseq
    %v191 = vshrl.u32 %v190, 7
    %v192 = vsub.s32 %v189, %v191
    %v193 = vrot.slane %v179, %v192
    %v194 = vcombine.high %v186, %v186
    %v195 = vcombine.high %v193, %v193
    %v196 = vcombine.high %v48, %v48
    %v198 = vunpack.c.l.s4 1983009808
    %v199 = vunpack.c.0.s8 %v198
    %v200 = vlaneseq
    %v201 = vshrl.u32 %v200, 7
    %v202 = vsub.s32 %v199, %v201
    %v203 = vrot.slane %v48, %v202
    %v205 = vunpack.c.l.s4 1983009808
    %v206 = vunpack.c.0.s8 %v205
    %v207 = vlaneseq
    %v208 = vshrl.u32 %v207, 7
    %v209 = vsub.s32 %v206, %v208
    %v210 = vrot.slane %v196, %v209
    %v211 = vcombine.high %v203, %v203
    %v212 = vcombine.high %v210, %v210
    %221 = vmatprep.subr.mxu0 0.0
    %222 = vmatpush1.msra.mxu0 %v49
    %223 = vmatprep.subr.mxu0 0.0
    %224 = vmatpush1.msra.mxu0 %v50
    %225 = vmatprep.subr.mxu0 0.0
    %226 = vmatpush1.msra.mxu0 %v51
    %227 = vmatprep.subr.mxu0 0.0
    %228 = vmatpush1.msra.mxu0 %v52
    %229 = vmatprep.subr.mxu0 0.0
    %230 = vmatpush1.msra.mxu0 %v53
    %231 = vmatprep.subr.mxu0 0.0
    %232 = vmatpush1.msra.mxu0 %v54
    %233 = vmatprep.subr.mxu0 0.0
    %234 = vmatpush1.msra.mxu0 %v55
    %235 = vmatprep.subr.mxu0 0.0
    %236 = vmatpush1.msra.mxu0 %v56
    %237 = vmatprep.subr.mxu0 0.0
    %238 = vmatpush1.msra.mxu0 %v57
    %239 = vmatprep.subr.mxu0 0.0
    %240 = vmatpush1.msra.mxu0 %v58
    %241 = vmatprep.subr.mxu0 0.0
    %242 = vmatpush1.msra.mxu0 %v59
    %243 = vmatprep.subr.mxu0 0.0
    %244 = vmatpush1.msra.mxu0 %v60
    %245 = vmatprep.subr.mxu0 0.0
    %246 = vmatpush1.msra.mxu0 %v61
    %247 = vmatprep.subr.mxu0 0.0
    %248 = vmatpush1.msra.mxu0 %v62
    %249 = vmatprep.subr.mxu0 0.0
    %250 = vmatpush1.msra.mxu0 %v63
    %251 = vmatprep.subr.mxu0 0.0
    %252 = vmatpush1.msra.mxu0 %v64
    %253 = vmatprep.subr.mxu0 0.0
    %254 = vmatpush1.msra.mxu0 %v65
    %255 = vmatprep.subr.mxu0 0.0
    %256 = vmatpush1.msra.mxu0 %v66
    %257 = vmatprep.subr.mxu0 0.0
    %258 = vmatpush1.msra.mxu0 %v67
    %259 = vmatprep.subr.mxu0 0.0
    %260 = vmatpush1.msra.mxu0 %v68
    %261 = vmatprep.subr.mxu0 0.0
    %262 = vmatpush1.msra.mxu0 %v69
    %263 = vmatprep.subr.mxu0 0.0
    %264 = vmatpush1.msra.mxu0 %v70
    %265 = vmatprep.subr.mxu0 0.0
    %266 = vmatpush1.msra.mxu0 %v71
    %267 = vmatprep.subr.mxu0 0.0
    %268 = vmatpush1.msra.mxu0 %v72
    %269 = vmatprep.subr.mxu0 0.0
    %270 = vmatpush1.msra.mxu0 %v73
    %271 = vmatprep.subr.mxu0 0.0
    %272 = vmatpush1.msra.mxu0 %v74
    %273 = vmatprep.subr.mxu0 0.0
    %274 = vmatpush1.msra.mxu0 %v75
    %275 = vmatprep.subr.mxu0 0.0
    %276 = vmatpush1.msra.mxu0 %v76
    %277 = vmatprep.subr.mxu0 0.0
    %278 = vmatpush1.msra.mxu0 %v77
    %279 = vmatprep.subr.mxu0 0.0
    %280 = vmatpush1.msra.mxu0 %v78
    %281 = vmatprep.subr.mxu0 0.0
    %282 = vmatpush1.msra.mxu0 %v79
    %283 = vmatprep.subr.mxu0 0.0
    %284 = vmatpush1.msra.mxu0 %v80
    %285 = vmatprep.mubr.f32.mxu0 %v194
    %286 = vmatmul.mubr.f32.gmra.mrb[0].mxu0 %v186
    %v287 = vpop.f32.mrb[0].mxu0
    %v288 = vadd.f32 0.0, %v287
    %v289 = vpop.f32.mrb[0].mxu0
    %290 = vdwg.mxu0
    %291 = vmatprep.subr.mxu0 0.0
    %292 = vmatpush1.msra.mxu0 %v81
    %293 = vmatprep.subr.mxu0 0.0
    %294 = vmatpush1.msra.mxu0 %v82
    %295 = vmatprep.subr.mxu0 0.0
    %296 = vmatpush1.msra.mxu0 %v83
    %297 = vmatprep.subr.mxu0 0.0
    %298 = vmatpush1.msra.mxu0 %v84
    %299 = vmatprep.subr.mxu0 0.0
    %300 = vmatpush1.msra.mxu0 %v85
    %301 = vmatprep.subr.mxu0 0.0
    %302 = vmatpush1.msra.mxu0 %v86
    %303 = vmatprep.subr.mxu0 0.0
    %304 = vmatpush1.msra.mxu0 %v87
    %305 = vmatprep.subr.mxu0 0.0
    %306 = vmatpush1.msra.mxu0 %v88
    %307 = vmatprep.subr.mxu0 0.0
    %308 = vmatpush1.msra.mxu0 %v89
    %309 = vmatprep.subr.mxu0 0.0
    %310 = vmatpush1.msra.mxu0 %v90
    %311 = vmatprep.subr.mxu0 0.0
    %312 = vmatpush1.msra.mxu0 %v91
    %313 = vmatprep.subr.mxu0 0.0
    %314 = vmatpush1.msra.mxu0 %v92
    %315 = vmatprep.subr.mxu0 0.0
    %316 = vmatpush1.msra.mxu0 %v93
    %317 = vmatprep.subr.mxu0 0.0
    %318 = vmatpush1.msra.mxu0 %v94
    %319 = vmatprep.subr.mxu0 0.0
    %320 = vmatpush1.msra.mxu0 %v95
    %321 = vmatprep.subr.mxu0 0.0
    %322 = vmatpush1.msra.mxu0 %v96
    %323 = vmatprep.subr.mxu0 0.0
    %324 = vmatpush1.msra.mxu0 %v97
    %325 = vmatprep.subr.mxu0 0.0
    %326 = vmatpush1.msra.mxu0 %v98
    %327 = vmatprep.subr.mxu0 0.0
    %328 = vmatpush1.msra.mxu0 %v99
    %329 = vmatprep.subr.mxu0 0.0
    %330 = vmatpush1.msra.mxu0 %v100
    %331 = vmatprep.subr.mxu0 0.0
    %332 = vmatpush1.msra.mxu0 %v101
    %333 = vmatprep.subr.mxu0 0.0
    %334 = vmatpush1.msra.mxu0 %v102
    %335 = vmatprep.subr.mxu0 0.0
    %336 = vmatpush1.msra.mxu0 %v103
    %337 = vmatprep.subr.mxu0 0.0
    %338 = vmatpush1.msra.mxu0 %v104
    %339 = vmatprep.subr.mxu0 0.0
    %340 = vmatpush1.msra.mxu0 %v105
    %341 = vmatprep.subr.mxu0 0.0
    %342 = vmatpush1.msra.mxu0 %v106
    %343 = vmatprep.subr.mxu0 0.0
    %344 = vmatpush1.msra.mxu0 %v107
    %345 = vmatprep.subr.mxu0 0.0
    %346 = vmatpush1.msra.mxu0 %v108
    %347 = vmatprep.subr.mxu0 0.0
    %348 = vmatpush1.msra.mxu0 %v109
    %349 = vmatprep.subr.mxu0 0.0
    %350 = vmatpush1.msra.mxu0 %v110
    %351 = vmatprep.subr.mxu0 0.0
    %352 = vmatpush1.msra.mxu0 %v111
    %353 = vmatprep.subr.mxu0 0.0
    %354 = vmatpush1.msra.mxu0 %v112
    %355 = vmatprep.mubr.f32.mxu0 %v195
    %356 = vmatmul.mubr.f32.gmra.mrb[0].mxu0 %v193
    %v357 = vpop.f32.mrb[0].mxu0
    %v358 = vadd.f32 %v288, %v357
    %v359 = vpop.f32.mrb[0].mxu0
    %360 = vdwg.mxu0
    %361 = vmatprep.subr.mxu0 0.0
    %362 = vmatpush1.msra.mxu0 %v113
    %363 = vmatprep.subr.mxu0 0.0
    %364 = vmatpush1.msra.mxu0 %v114
    %365 = vmatprep.subr.mxu0 0.0
    %366 = vmatpush1.msra.mxu0 %v115
    %367 = vmatprep.subr.mxu0 0.0
    %368 = vmatpush1.msra.mxu0 %v116
    %369 = vmatprep.subr.mxu0 0.0
    %370 = vmatpush1.msra.mxu0 %v117
    %371 = vmatprep.subr.mxu0 0.0
    %372 = vmatpush1.msra.mxu0 %v118
    %373 = vmatprep.subr.mxu0 0.0
    %374 = vmatpush1.msra.mxu0 %v119
    %375 = vmatprep.subr.mxu0 0.0
    %376 = vmatpush1.msra.mxu0 %v120
    %377 = vmatprep.subr.mxu0 0.0
    %378 = vmatpush1.msra.mxu0 %v121
    %379 = vmatprep.subr.mxu0 0.0
    %380 = vmatpush1.msra.mxu0 %v122
    %381 = vmatprep.subr.mxu0 0.0
    %382 = vmatpush1.msra.mxu0 %v123
    %383 = vmatprep.subr.mxu0 0.0
    %384 = vmatpush1.msra.mxu0 %v124
    %385 = vmatprep.subr.mxu0 0.0
    %386 = vmatpush1.msra.mxu0 %v125
    %387 = vmatprep.subr.mxu0 0.0
    %388 = vmatpush1.msra.mxu0 %v126
    %389 = vmatprep.subr.mxu0 0.0
    %390 = vmatpush1.msra.mxu0 %v127
    %391 = vmatprep.subr.mxu0 0.0
    %392 = vmatpush1.msra.mxu0 %v128
    %393 = vmatprep.subr.mxu0 0.0
    %394 = vmatpush1.msra.mxu0 %v129
    %395 = vmatprep.subr.mxu0 0.0
    %396 = vmatpush1.msra.mxu0 %v130
    %397 = vmatprep.subr.mxu0 0.0
    %398 = vmatpush1.msra.mxu0 %v131
    %399 = vmatprep.subr.mxu0 0.0
    %400 = vmatpush1.msra.mxu0 %v132
    %401 = vmatprep.subr.mxu0 0.0
    %402 = vmatpush1.msra.mxu0 %v133
    %403 = vmatprep.subr.mxu0 0.0
    %404 = vmatpush1.msra.mxu0 %v134
    %405 = vmatprep.subr.mxu0 0.0
    %406 = vmatpush1.msra.mxu0 %v135
    %407 = vmatprep.subr.mxu0 0.0
    %408 = vmatpush1.msra.mxu0 %v136
    %409 = vmatprep.subr.mxu0 0.0
    %410 = vmatpush1.msra.mxu0 %v137
    %411 = vmatprep.subr.mxu0 0.0
    %412 = vmatpush1.msra.mxu0 %v138
    %413 = vmatprep.subr.mxu0 0.0
    %414 = vmatpush1.msra.mxu0 %v139
    %415 = vmatprep.subr.mxu0 0.0
    %416 = vmatpush1.msra.mxu0 %v140
    %417 = vmatprep.subr.mxu0 0.0
    %418 = vmatpush1.msra.mxu0 %v141
    %419 = vmatprep.subr.mxu0 0.0
    %420 = vmatpush1.msra.mxu0 %v142
    %421 = vmatprep.subr.mxu0 0.0
    %422 = vmatpush1.msra.mxu0 %v143
    %423 = vmatprep.subr.mxu0 0.0
    %424 = vmatpush1.msra.mxu0 %v144
    %425 = vmatprep.mubr.f32.mxu0 %v211
    %426 = vmatmul.mubr.f32.gmra.mrb[0].mxu0 %v203
    %v427 = vpop.f32.mrb[0].mxu0
    %v428 = vadd.f32 %v358, %v427
    %v429 = vpop.f32.mrb[0].mxu0
    %430 = vdwg.mxu0
    %431 = vmatprep.subr.mxu0 0.0
    %432 = vmatpush1.msra.mxu0 %v145
    %433 = vmatprep.subr.mxu0 0.0
    %434 = vmatpush1.msra.mxu0 %v146
    %435 = vmatprep.subr.mxu0 0.0
    %436 = vmatpush1.msra.mxu0 %v147
    %437 = vmatprep.subr.mxu0 0.0
    %438 = vmatpush1.msra.mxu0 %v148
    %439 = vmatprep.subr.mxu0 0.0
    %440 = vmatpush1.msra.mxu0 %v149
    %441 = vmatprep.subr.mxu0 0.0
    %442 = vmatpush1.msra.mxu0 %v150
    %443 = vmatprep.subr.mxu0 0.0
    %444 = vmatpush1.msra.mxu0 %v151
    %445 = vmatprep.subr.mxu0 0.0
    %446 = vmatpush1.msra.mxu0 %v152
    %447 = vmatprep.subr.mxu0 0.0
    %448 = vmatpush1.msra.mxu0 %v153
    %449 = vmatprep.subr.mxu0 0.0
    %450 = vmatpush1.msra.mxu0 %v154
    %451 = vmatprep.subr.mxu0 0.0
    %452 = vmatpush1.msra.mxu0 %v155
    %453 = vmatprep.subr.mxu0 0.0
    %454 = vmatpush1.msra.mxu0 %v156
    %455 = vmatprep.subr.mxu0 0.0
    %456 = vmatpush1.msra.mxu0 %v157
    %457 = vmatprep.subr.mxu0 0.0
    %458 = vmatpush1.msra.mxu0 %v158
    %459 = vmatprep.subr.mxu0 0.0
    %460 = vmatpush1.msra.mxu0 %v159
    %461 = vmatprep.subr.mxu0 0.0
    %462 = vmatpush1.msra.mxu0 %v160
    %463 = vmatprep.subr.mxu0 0.0
    %464 = vmatpush1.msra.mxu0 %v161
    %465 = vmatprep.subr.mxu0 0.0
    %466 = vmatpush1.msra.mxu0 %v162
    %467 = vmatprep.subr.mxu0 0.0
    %468 = vmatpush1.msra.mxu0 %v163
    %469 = vmatprep.subr.mxu0 0.0
    %470 = vmatpush1.msra.mxu0 %v164
    %471 = vmatprep.subr.mxu0 0.0
    %472 = vmatpush1.msra.mxu0 %v165
    %473 = vmatprep.subr.mxu0 0.0
    %474 = vmatpush1.msra.mxu0 %v166
    %475 = vmatprep.subr.mxu0 0.0
    %476 = vmatpush1.msra.mxu0 %v167
    %477 = vmatprep.subr.mxu0 0.0
    %478 = vmatpush1.msra.mxu0 %v168
    %479 = vmatprep.subr.mxu0 0.0
    %480 = vmatpush1.msra.mxu0 %v169
    %481 = vmatprep.subr.mxu0 0.0
    %482 = vmatpush1.msra.mxu0 %v170
    %483 = vmatprep.subr.mxu0 0.0
    %484 = vmatpush1.msra.mxu0 %v171
    %485 = vmatprep.subr.mxu0 0.0
    %486 = vmatpush1.msra.mxu0 %v172
    %487 = vmatprep.subr.mxu0 0.0
    %488 = vmatpush1.msra.mxu0 %v173
    %489 = vmatprep.subr.mxu0 0.0
    %490 = vmatpush1.msra.mxu0 %v174
    %491 = vmatprep.subr.mxu0 0.0
    %492 = vmatpush1.msra.mxu0 %v175
    %493 = vmatprep.subr.mxu0 0.0
    %494 = vmatpush1.msra.mxu0 %v176
    %495 = vmatprep.mubr.f32.mxu0 %v212
    %496 = vmatmul.mubr.f32.gmra.mrb[0].mxu0 %v210
    %v497 = vpop.f32.mrb[0].mxu0
    %v498 = vadd.f32 %v428, %v497
    %v499 = vpop.f32.mrb[0].mxu0
    %500 = vdwg.mxu0
    %v501 = vadd.f32 %v46, %v498
    %502 = vst [vmem:[#allocation2] sm:$0x3] %v501
    // Predicated region
    $region26: #{tpu_custom_call.1} parent=1 // pred_check
      %p503 = pneg %p41
    $region27: #{tpu_custom_call.1} parent=1 // pred_check_branch
      %505 = sbr.rel (%p503) target = $region29
    $region28: #{tpu_custom_call.1} parent=1 // pred_region
      %v506 = vld [vmem:[#allocation2] sm:$0x3]
      %v507 = vld [vmem:[%s2] sm:$0x1]
      %v509 = vlaneseq
      %v510 = vshrl.u32 %v509, 7
      %v511 = vsub.s32 0, %v510
      %v512 = vrot.slane %v507, %v511
      %v514 = vadd.f32 %v506, %v512
      %515 = vst [vmem:[#allocation8] sm:$0x3] %v514
    $region29: #{tpu_custom_call.1} parent=1 // pred_fallthru
      _
    // Predicated region
    $region30: #{tpu_custom_call.1} parent=1 // pred_check
      _
    $region31: #{tpu_custom_call.1} parent=1 // pred_check_branch
      %517 = sbr.rel (0) target = $region33
    $region32: #{tpu_custom_call.1} parent=1 // pred_region
      %s519 = ssub.s32 32, 32
      %520 = vsyncadd [#allocation5], %s519
      %s522 = sshll.u32 [#allocation8], 4
      %s523 = int_to_ptr.vmem [resolvable:$true] %s522
      %525 = dma.vmem_to_hbm [thread:$0]  %s523, 32, %s3, [#allocation5]
    $region33: #{tpu_custom_call.1} parent=1 // pred_fallthru
      _
    // Predicated region
    $region34: #{tpu_custom_call.1} parent=1 // pred_check
      _
    $region35: #{tpu_custom_call.1} parent=1 // pred_check_branch
      %527 = sbr.rel (0) target = $region37
    $region36: #{tpu_custom_call.1} parent=1 // pred_region
      %528 = dma.done [#allocation5], 32
    $region37: #{tpu_custom_call.1} parent=1 // pred_fallthru
      _
    %529 = vsyncpa [#allocation4], 1
    %530 = vsyncpa [#allocation7], 1
    %531 = vsyncpa [#allocation5], 1

</llo_original>
